<compile_context>
chip_gen: v7x
topology: tpu7x:2x2x1
jax: 0.10.0
libtpu: 0.0.40
codegen_flags: <defaults>
</compile_context>

<pallas_src>
import jax
import jax.numpy as jnp
from jax import lax
from jax.experimental import pallas as pl
from jax.experimental.pallas import tpu as pltpu


_LANE_TILE = 1024  # rows per grid step along the lane axis (fits v7x 64 MiB VMEM easily)


def _round_up(n, m):
    return ((n + m - 1) // m) * m


def _pad_and_tile(num_rows):
    tile = min(_LANE_TILE, _round_up(num_rows, 128))
    padded = _round_up(num_rows, tile)
    return tile, padded


# ----------------------------- kernels -------------------------------------


def _softmax_kernel(xt_ref, out_ref):
    """Softmax over axis 0 (ops on sublanes, layers on lanes)."""
    x = xt_ref[...].astype(jnp.float32)
    m = jnp.max(x, axis=0, keepdims=True)
    e = jnp.exp(x - m)
    inv_s = 1.0 / jnp.sum(e, axis=0, keepdims=True)   # one divide per column, then mults
    out_ref[...] = (e * inv_s).astype(out_ref.dtype)


def _gumbel_hard_kernel(temp_ref, xt_ref, u_ref, out_ref):
    """Forward-only straight-through Gumbel-Softmax: output == hard one-hot.

    temp_ref: (1,) f32 scalar in SMEM (runtime data -> no recompile on anneal).
    xt_ref / u_ref / out_ref: [num_ops, lane_tile] (reduction over axis 0).
    """
    inv_t = 1.0 / temp_ref[0]
    u = u_ref[...]
    gumbel = -jnp.log(-jnp.log(u + 1e-8) + 1e-8)
    x = (xt_ref[...].astype(jnp.float32) + gumbel) * inv_t

    n_ops = x.shape[0]
    ids = lax.broadcasted_iota(jnp.int32, x.shape, 0)
    xmax = jnp.max(x, axis=0, keepdims=True)
    # first-max tie-break (same as torch.argmax)
    first_idx = jnp.min(jnp.where(x >= xmax, ids, n_ops), axis=0, keepdims=True)
    out_ref[...] = (ids == first_idx).astype(out_ref.dtype)


# ----------------------------- jitted wrappers ------------------------------


@jax.jit
def _softmax_rows(x2d):
    """Row-wise softmax of x2d [R, O] via the lane-dense transposed kernel."""
    r, o = x2d.shape
    tile, rp = _pad_and_tile(r)
    xt = jnp.pad(x2d.T.astype(jnp.float32), ((0, 0), (0, rp - r)))
    out_t = pl.pallas_call(
        _softmax_kernel,
        out_shape=jax.ShapeDtypeStruct((o, rp), jnp.float32),
        grid=(rp // tile,),
        in_specs=[pl.BlockSpec((o, tile), lambda i: (0, i))],
        out_specs=pl.BlockSpec((o, tile), lambda i: (0, i)),
        compiler_params=pltpu.CompilerParams(dimension_semantics=("parallel",)),
    )(xt)
    return out_t[:, :r].T


@jax.jit
def _gumbel_hard_rows(x2d, key, temperature):
    """Row-wise straight-through Gumbel-Softmax forward of x2d [R, O]."""
    r, o = x2d.shape
    tile, rp = _pad_and_tile(r)
    xt = jnp.pad(x2d.T.astype(jnp.float32), ((0, 0), (0, rp - r)))
    # iid U[0,1) noise generated directly in the transposed/padded layout
    u = jax.random.uniform(key, (o, rp), dtype=jnp.float32)
    temp = jnp.reshape(temperature, (1,)).astype(jnp.float32)
    out_t = pl.pallas_call(
        _gumbel_hard_kernel,
        out_shape=jax.ShapeDtypeStruct((o, rp), jnp.float32),
        grid=(rp // tile,),
        in_specs=[
            pl.BlockSpec(memory_space=pltpu.SMEM),        # temperature scalar
            pl.BlockSpec((o, tile), lambda i: (0, i)),    # logits (transposed)
            pl.BlockSpec((o, tile), lambda i: (0, i)),    # uniform noise
        ],
        out_specs=pl.BlockSpec((o, tile), lambda i: (0, i)),
        compiler_params=pltpu.CompilerParams(dimension_semantics=("parallel",)),
    )(temp, xt, u)
    return out_t[:, :r].T


# ----------------------------- module ---------------------------------------


class BatchedArchitectureUpdateTPU:
    """JAX/Pallas equivalent of the PyTorch module (forward pass only)."""

    def __init__(self, num_layers, num_ops_per_layer, key):
        self.num_layers = num_layers
        self.num_ops_per_layer = num_ops_per_layer
        init_key, self._key = jax.random.split(key)
        # deterministic init: randn * 0.1
        self.arch_params = (
            jax.random.normal(
                init_key, (num_layers, num_ops_per_layer), dtype=jnp.float32
            )
            * 0.1
        )
        self.temperature = 5.0
        self.min_temperature = 0.1
        self.anneal_rate = 0.98
        self.training = True

    def forward(self, layer_idx=None):
        if layer_idx is not None:
            logits = self.arch_params[layer_idx]     # glue: slice in plain JAX
        else:
            logits = self.arch_params
        orig_shape = logits.shape
        x2d = logits.reshape(-1, orig_shape[-1])
        if self.training:
            self._key, sub = jax.random.split(self._key)
            out = _gumbel_hard_rows(
                x2d, sub, jnp.asarray(self.temperature, dtype=jnp.float32)
            )
        else:
            out = _softmax_rows(x2d)
        return out.reshape(orig_shape)

    def anneal_temperature(self):
        self.temperature = max(self.min_temperature, self.temperature * self.anneal_rate)
        return self.temperature

    def get_dominant_ops(self, threshold=0.5):
        probs = _softmax_rows(self.arch_params)
        return (probs > threshold).astype(jnp.float32)


# ------------------------------- main ----------------------------------------

if __name__ == "__main__":
    key = jax.random.PRNGKey(0)
    num_layers, num_ops = 8, 8

    mod = BatchedArchitectureUpdateTPU(num_layers, num_ops, key)

    # --- eval-mode forward (all layers) ---
    mod.training = False
    w_eval = jax.block_until_ready(mod.forward())
    ref = jax.nn.softmax(mod.arch_params, axis=-1)
    assert w_eval.shape == (num_layers, num_ops)
    assert jnp.allclose(w_eval, ref, atol=1e-5), "eval softmax mismatch"

    # --- eval-mode forward (single layer) ---
    w_layer = jax.block_until_ready(mod.forward(layer_idx=3))
    ref_layer = jax.nn.softmax(mod.arch_params[3], axis=-1)
    assert w_layer.shape == (num_ops,)
    assert jnp.allclose(w_layer, ref_layer, atol=1e-5), "eval layer softmax mismatch"

    # --- training-mode forward (straight-through Gumbel-Softmax) ---
    mod.training = True
    w_train = jax.block_until_ready(mod.forward())
    assert w_train.shape == (num_layers, num_ops)
    assert jnp.allclose(jnp.sum(w_train, axis=-1), 1.0, atol=1e-5), "rows must sum to 1"
    assert jnp.allclose(jnp.max(w_train, axis=-1), 1.0, atol=1e-5), "rows must be one-hot"

    # --- anneal temperature and forward again: no recompile (temperature is data) ---
    mod.anneal_temperature()
    w_train2 = jax.block_until_ready(mod.forward())
    assert w_train2.shape == (num_layers, num_ops)
    assert jnp.allclose(jnp.sum(w_train2, axis=-1), 1.0, atol=1e-5)

    # --- dominant ops helper (reuses the softmax kernel) ---
    dom = jax.block_until_ready(mod.get_dominant_ops())
    assert dom.shape == (num_layers, num_ops)

    print("KERNEL_OK")
</pallas_src>

<mosaic_0001>
module attributes {stable_mosaic.version = 11 : i64} {
  func.func @_softmax_kernel(%arg0: i32, %arg1: memref<8x128xf32, #tpu.memory_space<vmem>>, %arg2: memref<8x128xf32, #tpu.memory_space<vmem>>) attributes {dimension_semantics = [#tpu.dimension_semantics<parallel>], iteration_bounds = array<i64: 1>, scalar_prefetch = 0 : i64, scratch_operands = 0 : i64, tpu.core_type = #tpu.core_type<tc>, window_params = [{transform_indices = @transform_0, window_bounds = array<i64: 8, 128>}, {transform_indices = @transform_1, window_bounds = array<i64: 8, 128>}]} {
    %c0 = arith.constant 0 : index
    %c0_0 = arith.constant 0 : index
    %0 = vector.load %arg1[%c0, %c0_0] : memref<8x128xf32, #tpu.memory_space<vmem>>, vector<8x128xf32>
    %cst = arith.constant dense<0xFF800000> : vector<128xf32>
    %1 = vector.multi_reduction <maximumf>, %0, %cst [0] : vector<8x128xf32> to vector<128xf32>
    %2 = vector.shape_cast %1 : vector<128xf32> to vector<1x128xf32>
    %3 = vector.broadcast %2 : vector<1x128xf32> to vector<8x128xf32>
    %4 = arith.subf %0, %3 : vector<8x128xf32>
    %5 = math.exp %4 : vector<8x128xf32>
    %cst_1 = arith.constant dense<0.000000e+00> : vector<128xf32>
    %6 = vector.multi_reduction <add>, %5, %cst_1 [0] : vector<8x128xf32> to vector<128xf32>
    %7 = vector.shape_cast %6 : vector<128xf32> to vector<1x128xf32>
    %cst_2 = arith.constant 1.000000e+00 : f32
    %8 = vector.broadcast %cst_2 : f32 to vector<1x128xf32>
    %9 = arith.divf %8, %7 : vector<1x128xf32>
    %10 = vector.broadcast %9 : vector<1x128xf32> to vector<8x128xf32>
    %11 = arith.mulf %5, %10 : vector<8x128xf32>
    %c0_3 = arith.constant 0 : index
    %c0_4 = arith.constant 0 : index
    %12 = vector.load %arg2[%c0_3, %c0_4] : memref<8x128xf32, #tpu.memory_space<vmem>>, vector<8x128xf32>
    tpu.vector_store %arg2[%c0_3, %c0_4], %11 {strides = array<i32>} : memref<8x128xf32, #tpu.memory_space<vmem>>, vector<8x128xf32>,
    return
  }
  func.func @transform_0(%arg0: i32) -> (i32, i32) {
    %c0_i32 = arith.constant 0 : i32
    %c0_i32_0 = arith.constant 0 : i32
    return %c0_i32, %arg0 : i32, i32
  }
  func.func @transform_1(%arg0: i32) -> (i32, i32) {
    %c0_i32 = arith.constant 0 : i32
    %c0_i32_0 = arith.constant 0 : i32
    return %c0_i32, %arg0 : i32, i32
  }
}

</mosaic_0001>

<llo_original>
// kernel: _softmax_rows.1
$region0: #{_softmax_rows.1}
  #allocation0 [shape = 'u32[]', space=smem, size = 0x4, offset = 0x4, fixed_abs, tag = 'smem constant byte address 0x4 - core index']
  #allocation1 [shape = 'u32[144,128]{1,0:T(1,128)}', space=vmem, size = 0x12000, scoped, tag = 'internal scratch']
  %s0 = inlined_call_operand.vmem [shape: f32[8,128], index: 0, kind: input, shape index: {}]
  %s1 = inlined_call_operand.vmem [shape: f32[8,128], index: 1, kind: output, shape index: {}]
  %s2 = sld [smem:[#allocation0]]
  $region14: #{_softmax_rows.1} parent=0
    _
  %s4 = ssub.s32 1, %s2
  %s5 = scalar_select 0, %s4, %s2
  // Predicated region
  $region2: #{_softmax_rows.1} parent=0 // pred_check
    _
  $region3: #{_softmax_rows.1} parent=0 // pred_check_branch
    %7 = sbr.rel (0) target = $region5
  $region4: #{_softmax_rows.1} parent=0 // pred_region
    _
  $region5: #{_softmax_rows.1} parent=0 // pred_fallthru
    _
  %v8 = vld [vmem:[%s0] sm:$0xff]
  %v9 = vrot.slane %v8, 4
  %v10 = vmax.f32 %v8, %v9
  %v11 = vrot.slane %v10, 2
  %v12 = vmax.f32 %v10, %v11
  %v13 = vrot.slane %v12, 1
  %v14 = vmax.f32 %v12, %v13
  %v15 = vsub.f32 %v8, %v14
  %v16 = vmul.f32 %v15, 1.442695
  %v17 = vpow.pop %v16
  %v18 = vrot.slane %v17, 4
  %v19 = vadd.f32 %v17, %v18
  %v20 = vrot.slane %v19, 2
  %v21 = vadd.f32 %v19, %v20
  %v22 = vrot.slane %v21, 1
  %v23 = vadd.f32 %v21, %v22
  %v24 = vrcp.pop %v23
  %v25 = vmul.f32 1.0, %v24
  %v26 = vmul.f32 %v17, %v25
  %27 = vst [vmem:[%s1] sm:$0xff] %v26
  // Predicated region
  $region6: #{_softmax_rows.1} parent=0 // pred_check
    _
  $region7: #{_softmax_rows.1} parent=0 // pred_check_branch
    %29 = sbr.rel (0) target = $region9
  $region8: #{_softmax_rows.1} parent=0 // pred_region
    _
  $region9: #{_softmax_rows.1} parent=0 // pred_fallthru
    _
  // Predicated region
  $region10: #{_softmax_rows.1} parent=0 // pred_check
    _
  $region11: #{_softmax_rows.1} parent=0 // pred_check_branch
    %31 = sbr.rel (0) target = $region13
  $region12: #{_softmax_rows.1} parent=0 // pred_region
    _
  $region13: #{_softmax_rows.1} parent=0 // pred_fallthru
    _

</llo_original>
